<compile_context>
chip_gen: v5e
topology: v5e:2x2
jax: 0.10.0
libtpu: 0.0.40
codegen_flags: <defaults>
</compile_context>

<pallas_src>
import functools

import jax
import jax.numpy as jnp
import numpy as np
from jax import lax
from jax.experimental import pallas as pl
from jax.experimental.pallas import tpu as pltpu


def _layernorm_kernel(x_ref, g_ref, o_ref, *, eps, inv_c):
    """One grid step.  The channel axis is always axis 1 of the block.

    3-D path: x_ref (bn, C, T)        g_ref (1, C, 1)
    4-D path: x_ref (bn, C, S, 128)   g_ref (1, C, 1, 128)
    """
    x = x_ref[...].astype(jnp.float32)
    # Two-pass stats (numerically stable): mean, then centered 2nd moment.
    mean = jnp.sum(x, axis=1, keepdims=True) * inv_c
    xc = x - mean
    var = jnp.sum(xc * xc, axis=1, keepdims=True) * inv_c       # biased var
    y = xc * lax.rsqrt(var + eps) * g_ref[...].astype(jnp.float32)
    o_ref[...] = y.astype(o_ref.dtype)


def _choose_tiling(n, num_units, unit_bytes, unit_gran,
                   target_bytes=2 << 20, min_bytes=256 << 10, min_steps=2):
    """Pick (bn, t, n_tiles) with bn | n, t | num_units, t % unit_gran == 0.

    Block bytes = bn * t * unit_bytes.  Aim for [min_bytes, target_bytes]
    while keeping >= min_steps grid steps whenever the shape allows it."""
    valid_t = [d for d in range(num_units, 0, -1)
               if num_units % d == 0 and d % unit_gran == 0]
    # unit_gran always divides num_units, so valid_t is non-empty.
    t = valid_t[-1]
    for cand in valid_t:                       # decreasing
        if cand * unit_bytes <= target_bytes:
            t = cand
            break
    n_tiles = num_units // t

    bn = 1
    for b in range(2, n + 1):                  # grow the batch block if tiny
        if n % b:
            continue
        if (n // b) * n_tiles < min_steps:
            break
        if b * t * unit_bytes > target_bytes:
            break
        bn = b
        if bn * t * unit_bytes >= min_bytes:
            break

    if (n // bn) * n_tiles < min_steps:
        # Single-step grid: split the spatial tile so both v7x TensorCores
        # get work and the pipeline can double-buffer.
        for cand in valid_t:                   # decreasing -> largest split
            if (num_units // cand) * (n // bn) >= min_steps:
                t = cand
                n_tiles = num_units // cand
                break

    return bn, t, n_tiles


@jax.jit
def layernorm_forward(x_nchw, g):
    """Pallas LayerNorm.  x: (N, C, H, W); g: (1, C, 1, 1).  Returns NCHW."""
    n, c, h, w = x_nchw.shape
    hw = h * w
    elem_bytes = x_nchw.dtype.itemsize
    eps = 1e-5 if x_nchw.dtype == jnp.float32 else 1e-3
    sub = 8 * (4 // elem_bytes)                # packed sublane group per dtype

    # Lane-dense spatial axis (pad HW up to a multiple of 128 if needed).
    hw_pad = -(-hw // 128) * 128
    x = x_nchw.reshape(n, c, hw)               # free, contiguous reshape
    if hw_pad != hw:
        x = jnp.pad(x, ((0, 0), (0, 0), (0, hw_pad - hw)))
    num_units = hw_pad // 128                  # spatial in units of 128 lanes

    use_4d = (c < sub) and (num_units % sub == 0) and (num_units >= sub)

    if use_4d:
        # Small C: spatial fills sublanes and lanes; channel is an outer
        # axis, so the reduction is C-1 plain VPU adds with no padding.
        unit_bytes = c * 128 * elem_bytes
        bn, t, n_tiles = _choose_tiling(n, num_units, unit_bytes, sub)
        x_in = x.reshape(n, c, num_units, 128)
        g_in = jnp.broadcast_to(g.reshape(1, c, 1, 1), (1, c, 1, 128))
        x_spec = pl.BlockSpec((bn, c, t, 128), lambda i, j: (i, 0, j, 0))
        g_spec = pl.BlockSpec((1, c, 1, 128), lambda i, j: (0, 0, 0, 0))
        out_shape = jax.ShapeDtypeStruct((n, c, num_units, 128), x.dtype)
    else:
        # General path: channels on sublanes, spatial on lanes.
        c_rows = -(-c // sub) * sub            # sublane-padded VMEM footprint
        unit_bytes = c_rows * 128 * elem_bytes
        bn, t, n_tiles = _choose_tiling(n, num_units, unit_bytes, 1)
        x_in = x
        g_in = g.reshape(1, c, 1)
        x_spec = pl.BlockSpec((bn, c, t * 128), lambda i, j: (i, 0, j))
        g_spec = pl.BlockSpec((1, c, 1), lambda i, j: (0, 0, 0))
        out_shape = jax.ShapeDtypeStruct((n, c, hw_pad), x.dtype)

    # Working set: 2x double-buffered input + 2x output + ~3 f32 temps.
    blk_bytes = bn * t * unit_bytes
    blk_f32_bytes = blk_bytes * (4 // elem_bytes)
    vmem_limit = int(min(64 << 20,
                         max(32 << 20, 4 * blk_bytes + 4 * blk_f32_bytes)))

    cost = pl.CostEstimate(
        flops=int(7 * n * c * hw_pad),
        transcendentals=int(n * hw_pad),
        bytes_accessed=int(2 * n * c * hw_pad * elem_bytes),
    )

    kernel = functools.partial(_layernorm_kernel, eps=eps, inv_c=1.0 / c)
    out = pl.pallas_call(
        kernel,
        out_shape=out_shape,
        grid_spec=pltpu.PrefetchScalarGridSpec(
            num_scalar_prefetch=0,
            grid=(n // bn, n_tiles),
            in_specs=[x_spec, g_spec],
            out_specs=x_spec,
        ),
        compiler_params=pltpu.CompilerParams(
            dimension_semantics=("parallel", "parallel"),
            vmem_limit_bytes=vmem_limit),
        cost_estimate=cost,
    )(x_in, g_in)

    out = out.reshape(n, c, hw_pad)[:, :, :hw]
    return out.reshape(n, c, h, w)


def layernorm_reference(x, g):
    """Pure-JAX reference mirroring the PyTorch module."""
    eps = 1e-5 if x.dtype == jnp.float32 else 1e-3
    mean = jnp.mean(x, axis=1, keepdims=True)
    var = jnp.var(x, axis=1, keepdims=True)    # unbiased=False
    return (x - mean) * lax.rsqrt(var + eps) * g


if __name__ == "__main__":
    # LayerNorm(dim=4), input x: (N=2, C=4, H=16, W=16) NCHW
    N, DIM, H, W = 2, 4, 16, 16

    key = jax.random.PRNGKey(0)
    k_x, k_g = jax.random.split(key)
    x = jax.random.normal(k_x, (N, DIM, H, W), dtype=jnp.float32)
    g = 1.0 + 0.1 * jax.random.normal(k_g, (1, DIM, 1, 1), dtype=jnp.float32)

    out = layernorm_forward(x, g)
    out = jax.block_until_ready(out)

    ref = layernorm_reference(x, g)
    np.testing.assert_allclose(np.asarray(out), np.asarray(ref),
                               rtol=1e-5, atol=1e-6)
    assert out.shape == (N, DIM, H, W)

    # Extra coverage: small-C dense (4-D) path and the HW-padding path.
    for shape in [(1, 4, 32, 32), (1, 6, 10, 10)]:
        xk = jax.random.normal(k_x, shape, dtype=jnp.float32)
        gk = 1.0 + 0.1 * jax.random.normal(k_g, (1, shape[1], 1, 1),
                                           dtype=jnp.float32)
        ok = jax.block_until_ready(layernorm_forward(xk, gk))
        np.testing.assert_allclose(np.asarray(ok),
                                   np.asarray(layernorm_reference(xk, gk)),
                                   rtol=1e-5, atol=1e-6)

    print("KERNEL_OK")
</pallas_src>

<mosaic_0001>
module attributes {stable_mosaic.version = 11 : i64} {
  func.func @_layernorm_kernel(%arg0: i32, %arg1: i32, %arg2: memref<1x4x256xf32, #tpu.memory_space<vmem>>, %arg3: memref<1x4x1xf32, #tpu.memory_space<vmem>>, %arg4: memref<1x4x256xf32, #tpu.memory_space<vmem>>) attributes {dimension_semantics = [#tpu.dimension_semantics<parallel>, #tpu.dimension_semantics<parallel>], iteration_bounds = array<i64: 2, 1>, scalar_prefetch = 0 : i64, scratch_operands = 0 : i64, tpu.core_type = #tpu.core_type<tc>, window_params = [{transform_indices = @transform_0, window_bounds = array<i64: 1, 4, 256>}, {pipeline_mode = #tpu.pipeline_mode<synchronous>, transform_indices = @transform_1, window_bounds = array<i64: 1, 4, 1>}, {transform_indices = @transform_2, window_bounds = array<i64: 1, 4, 256>}]} {
    %c0 = arith.constant 0 : index
    %c0_0 = arith.constant 0 : index
    %c0_1 = arith.constant 0 : index
    %0 = vector.load %arg2[%c0, %c0_0, %c0_1] : memref<1x4x256xf32, #tpu.memory_space<vmem>>, vector<1x4x256xf32>
    %cst = arith.constant dense<0.000000e+00> : vector<1x256xf32>
    %1 = vector.multi_reduction <add>, %0, %cst [1] : vector<1x4x256xf32> to vector<1x256xf32>
    %2 = vector.shape_cast %1 : vector<1x256xf32> to vector<1x1x256xf32>
    %cst_2 = arith.constant 2.500000e-01 : f32
    %3 = vector.broadcast %cst_2 : f32 to vector<1x1x256xf32>
    %4 = arith.mulf %2, %3 : vector<1x1x256xf32>
    %5 = vector.broadcast %4 : vector<1x1x256xf32> to vector<1x4x256xf32>
    %6 = arith.subf %0, %5 : vector<1x4x256xf32>
    %7 = arith.mulf %6, %6 : vector<1x4x256xf32>
    %cst_3 = arith.constant dense<0.000000e+00> : vector<1x256xf32>
    %8 = vector.multi_reduction <add>, %7, %cst_3 [1] : vector<1x4x256xf32> to vector<1x256xf32>
    %9 = vector.shape_cast %8 : vector<1x256xf32> to vector<1x1x256xf32>
    %cst_4 = arith.constant 2.500000e-01 : f32
    %10 = vector.broadcast %cst_4 : f32 to vector<1x1x256xf32>
    %11 = arith.mulf %9, %10 : vector<1x1x256xf32>
    %cst_5 = arith.constant 9.99999974E-6 : f32
    %12 = vector.broadcast %cst_5 : f32 to vector<1x1x256xf32>
    %13 = arith.addf %11, %12 : vector<1x1x256xf32>
    %14 = math.rsqrt %13 : vector<1x1x256xf32>
    %15 = vector.broadcast %14 : vector<1x1x256xf32> to vector<1x4x256xf32>
    %16 = arith.mulf %6, %15 : vector<1x4x256xf32>
    %c0_6 = arith.constant 0 : index
    %c0_7 = arith.constant 0 : index
    %c0_8 = arith.constant 0 : index
    %17 = vector.load %arg3[%c0_6, %c0_7, %c0_8] : memref<1x4x1xf32, #tpu.memory_space<vmem>>, vector<1x4x1xf32>
    %18 = vector.broadcast %17 : vector<1x4x1xf32> to vector<1x4x256xf32>
    %19 = arith.mulf %16, %18 : vector<1x4x256xf32>
    %c0_9 = arith.constant 0 : index
    %c0_10 = arith.constant 0 : index
    %c0_11 = arith.constant 0 : index
    %20 = vector.load %arg4[%c0_9, %c0_10, %c0_11] : memref<1x4x256xf32, #tpu.memory_space<vmem>>, vector<1x4x256xf32>
    tpu.vector_store %arg4[%c0_9, %c0_10, %c0_11], %19 {strides = array<i32>} : memref<1x4x256xf32, #tpu.memory_space<vmem>>, vector<1x4x256xf32>,
    return
  }
  func.func @transform_0(%arg0: i32, %arg1: i32) -> (i32, i32, i32) {
    %c0_i32 = arith.constant 0 : i32
    %c0_i32_0 = arith.constant 0 : i32
    return %arg0, %c0_i32, %arg1 : i32, i32, i32
  }
  func.func @transform_1(%arg0: i32, %arg1: i32) -> (i32, i32, i32) {
    %c0_i32 = arith.constant 0 : i32
    %c0_i32_0 = arith.constant 0 : i32
    %c0_i32_1 = arith.constant 0 : i32
    %c0_i32_2 = arith.constant 0 : i32
    return %c0_i32, %c0_i32_0, %c0_i32_1 : i32, i32, i32
  }
  func.func @transform_2(%arg0: i32, %arg1: i32) -> (i32, i32, i32) {
    %c0_i32 = arith.constant 0 : i32
    %c0_i32_0 = arith.constant 0 : i32
    return %arg0, %c0_i32, %arg1 : i32, i32, i32
  }
}

</mosaic_0001>

<llo_original>
// kernel: layernorm_forward.1
$region0: #{layernorm_forward.1}
  #allocation0 [shape = 'u32[]', space=smem, size = 0x4, offset = 0x4, fixed_abs, tag = 'smem constant byte address 0x4 - core index']
  #allocation1 [shape = 'u32[72,128]{1,0:T(1,128)}', space=vmem, size = 0x9000, scoped, tag = 'internal scratch']
  %s0 = inlined_call_operand.vmem [shape: f32[2,4,256], index: 0, kind: input, shape index: {}]
  %s1 = inlined_call_operand.vmem [shape: f32[1,4,1], index: 1, kind: input, shape index: {}]
  %s2 = inlined_call_operand.vmem [shape: f32[2,4,256], index: 2, kind: output, shape index: {}]
  %s3 = sld [smem:[#allocation0]]
  $region41: #{layernorm_forward.1} parent=0
    _
  %s5 = ssub.s32 1, %s3
  %s6 = scalar_select 0, %s5, %s3
  loop: start=0, step=1, limit=4
  $region2: #{layernorm_forward.1} parent=0 // loop_pre_header
    _
  $region3: #{layernorm_forward.1} parent=0 // loop_header
    %s8 = sphi 0, %s12
    %p9 = scmp.ge.s32.totalorder %s8, 4
    %s15 = sphi 0, %s27
    %s16 = sphi 0, %s23
    %s17 = sphi 0, %s15
    %s18 = sphi 0, %s16
    %s19 = sphi 0, %s17
    %s20 = sphi 0, %s18
    %s32 = sphi 0, %s34
    %s35 = sphi 0, %s32
    %s36 = sphi 0, %s35
    %s52 = sphi 0, %s36
    %s56 = sphi 0, %s56
    %s58 = sphi 0, %s56
    %s59 = sphi 0, %s58
    %s73 = sphi 0, %s59
    %s81 = sphi 0, %s83
    %s84 = sphi 0, %s81
    %s85 = sphi 0, %s84
    %s101 = sphi 0, %s85
  $region4: #{layernorm_forward.1} parent=0 // loop_header_branch
    %11 = sbr.rel (%p9) target = $region8
  $region5: #{layernorm_forward.1} parent=0 // loop_body
    %s13 = ssub.s32 %s8, 1
    %s14 = ssub.s32 %s8, 2
    %s21 = sadd.s32 1, %s16
    %p22 = scmp.ge.s32.totalorder %s21, 1
    %s23 = scalar_select %p22, 0, %s21
    %s24 = sadd.s32 1, %s15
    %s25 = scalar_select %p22, %s24, %s15
    %p26 = scmp.ge.s32.totalorder %s25, 2
    %s27 = scalar_select %p26, 0, %s25
    %s28 = ssub.s32 %s15, %s27
    %s29 = ssub.s32 %s16, %s23
    %s30 = sor.u32 %s28, %s29
    %p31 = scmp.eq.s32.totalorder %s30, 0
    %s33 = sadd.s32 %s32, 1
    %s34 = scalar_select %p31, %s32, %s33
    %p37 = pneg %p31
    %p38 = scmp.eq.s32.totalorder %s8, 1
    %p39 = por %p37, %p38
    %p40 = scmp.ne.s32.totalorder %s32, %s35
    %p41 = scmp.eq.s32.totalorder %s8, 0
    %p42 = por %p40, %p41
    %p43 = scmp.ne.s32.totalorder %s32, %s35
    %p44 = scmp.eq.s32.totalorder %s13, 1
    %p45 = por %p43, %p44
    %p46 = scmp.ne.s32.totalorder %s35, %s36
    %p47 = scmp.eq.s32.totalorder %s13, 0
    %p48 = por %p46, %p47
    %p49 = scmp.ne.s32.totalorder %s35, %s36
    %p50 = scmp.eq.s32.totalorder %s14, 1
    %p51 = por %p49, %p50
    %p53 = scmp.ne.s32.totalorder %s36, %s52
    %p54 = scmp.eq.s32.totalorder %s14, 0
    %p55 = por %p53, %p54
    %s57 = sadd.s32 %s56, 1
    %p60 = scmp.eq.s32.totalorder %s8, 1
    %p61 = scmp.ne.s32.totalorder %s56, %s58
    %p62 = scmp.eq.s32.totalorder %s8, 0
    %p63 = por %p61, %p62
    %p64 = scmp.ne.s32.totalorder %s56, %s58
    %p65 = scmp.eq.s32.totalorder %s13, 1
    %p66 = por %p64, %p65
    %p67 = scmp.ne.s32.totalorder %s58, %s59
    %p68 = scmp.eq.s32.totalorder %s13, 0
    %p69 = por %p67, %p68
    %p70 = scmp.ne.s32.totalorder %s58, %s59
    %p71 = scmp.eq.s32.totalorder %s14, 1
    %p72 = por %p70, %p71
    %p74 = scmp.ne.s32.totalorder %s59, %s73
    %p75 = scmp.eq.s32.totalorder %s14, 0
    %p76 = por %p74, %p75
    %s77 = ssub.s32 %s15, %s27
    %s78 = ssub.s32 %s16, %s23
    %s79 = sor.u32 %s77, %s78
    %p80 = scmp.eq.s32.totalorder %s79, 0
    %s82 = sadd.s32 %s81, 1
    %s83 = scalar_select %p80, %s81, %s82
    %p86 = pneg %p80
    %p87 = scmp.eq.s32.totalorder %s8, 1
    %p88 = por %p86, %p87
    %p89 = scmp.ne.s32.totalorder %s81, %s84
    %p90 = scmp.eq.s32.totalorder %s8, 0
    %p91 = por %p89, %p90
    %p92 = scmp.ne.s32.totalorder %s81, %s84
    %p93 = scmp.eq.s32.totalorder %s13, 1
    %p94 = por %p92, %p93
    %p95 = scmp.ne.s32.totalorder %s84, %s85
    %p96 = scmp.eq.s32.totalorder %s13, 0
    %p97 = por %p95, %p96
    %p98 = scmp.ne.s32.totalorder %s84, %s85
    %p99 = scmp.eq.s32.totalorder %s14, 1
    %p100 = por %p98, %p99
    %p102 = scmp.ne.s32.totalorder %s85, %s101
    %p103 = scmp.eq.s32.totalorder %s14, 0
    %p104 = por %p102, %p103
    %p105 = scmp.le.s32.totalorder 1, %s8
    %p106 = scmp.lt.s32.totalorder %s8, 3
    %p107 = pnand %p105, %p106
    %p108 = pneg %p107
    // Predicated region
    $region9: #{layernorm_forward.1} parent=5 // pred_check
      _
    $region10: #{layernorm_forward.1} parent=5 // pred_check_branch
      %110 = sbr.rel (%p107) target = $region12
    $region11: #{layernorm_forward.1} parent=5 // pred_region
      %s111 = ssub.s32 %s8, 1
      // Predicated region
      $region13: #{layernorm_forward.1} parent=11 // pred_check
        %p112 = pneg %p69
      $region14: #{layernorm_forward.1} parent=11 // pred_check_branch
        %114 = sbr.rel (%p112) target = $region16
      $region15: #{layernorm_forward.1} parent=11 // pred_region
        _
      $region16: #{layernorm_forward.1} parent=11 // pred_fallthru
        _
    $region12: #{layernorm_forward.1} parent=5 // pred_fallthru
      _
    %p115 = scmp.lt.s32.totalorder %s8, 2
    // Predicated region
    $region17: #{layernorm_forward.1} parent=5 // pred_check
      %p116 = pneg %p115
    $region18: #{layernorm_forward.1} parent=5 // pred_check_branch
      %118 = sbr.rel (%p116) target = $region20
    $region19: #{layernorm_forward.1} parent=5 // pred_region
      // Predicated region
      $region21: #{layernorm_forward.1} parent=19 // pred_check
        %p119 = pneg %p42
      $region22: #{layernorm_forward.1} parent=19 // pred_check_branch
        %121 = sbr.rel (%p119) target = $region24
      $region23: #{layernorm_forward.1} parent=19 // pred_region
        %s122 = smul.u32 2, %s16
        %p123 = scmp.lt.s32.totalorder %s15, 1
        %s124 = scalar_select %p123, %s15, 1
        %p125 = scmp.lt.s32.totalorder %s122, 1
        %s126 = scalar_select %p125, %s122, 1
        %s127 = smul.addr %s124, 2
        %s128 = sadd.s32 %s126, %s127
        %s129 = smul.addr %s128, 4
        %s130 = scalar_lea.vmem %s0, %s129
        %s131 = smul.u32 2, %s16
      $region24: #{layernorm_forward.1} parent=19 // pred_fallthru
        _
    $region20: #{layernorm_forward.1} parent=5 // pred_fallthru
      _
    %p132 = scmp.le.s32.totalorder 1, %s8
    %p133 = scmp.lt.s32.totalorder %s8, 3
    %p134 = pnand %p132, %p133
    %p135 = pneg %p134
    // Predicated region
    $region25: #{layernorm_forward.1} parent=5 // pred_check
      _
    $region26: #{layernorm_forward.1} parent=5 // pred_check_branch
      %137 = sbr.rel (%p134) target = $region28
    $region27: #{layernorm_forward.1} parent=5 // pred_region
      %s138 = ssub.s32 %s8, 1
      %s139 = smul.u32 2, %s18
      %p140 = scmp.lt.s32.totalorder %s17, 1
      %s141 = scalar_select %p140, %s17, 1
      %p142 = scmp.lt.s32.totalorder %s139, 1
      %s143 = scalar_select %p142, %s139, 1
      %s144 = smul.addr %s141, 2
      %s145 = sadd.s32 %s143, %s144
      %s146 = smul.addr %s145, 4
      %s147 = scalar_lea.vmem %s0, %s146
      %p148 = pneg %p48
      %p149 = pneg %p45
      %p150 = pneg %p69
      %p151 = pneg %p66
      %p152 = pneg %p97
      %p153 = pneg %p94
      %s154 = smul.u32 2, %s18
      %p155 = scmp.lt.s32.totalorder %s17, 1
      %s156 = scalar_select %p155, %s17, 1
      %p157 = scmp.lt.s32.totalorder %s154, 1
      %s158 = scalar_select %p157, %s154, 1
      %s159 = smul.addr %s156, 2
      %s160 = sadd.s32 %s158, %s159
      %s161 = smul.addr %s160, 4
      %s162 = scalar_lea.vmem %s2, %s161
      %s163 = smul.u32 2, %s18
      %p164 = scmp.lt.s32.totalorder %s17, 1
      %s165 = scalar_select %p164, %s17, 1
      %p166 = scmp.lt.s32.totalorder %s163, 1
      %s167 = scalar_select %p166, %s163, 1
      %s168 = smul.addr %s165, 2
      %s169 = sadd.s32 %s167, %s168
      %s170 = smul.addr %s169, 4
      %s171 = scalar_lea.vmem %s0, %s170
      %s172 = smul.u32 2, %s18
      %s173 = smul.u32 2, %s18
      %p174 = scmp.lt.s32.totalorder %s17, 1
      %s175 = scalar_select %p174, %s17, 1
      %p176 = scmp.lt.s32.totalorder %s173, 1
      %s177 = scalar_select %p176, %s173, 1
      %s178 = smul.addr %s175, 2
      %s179 = sadd.s32 %s177, %s178
      %s180 = smul.addr %s179, 4
      %s181 = scalar_lea.vmem %s2, %s180
      %s182 = smul.u32 2, %s18
      %v183 = vld [vmem:[%s171] sm:$0xff]
      %185 = vst [vmem:[#allocation1] ss:$2 sm:$0xff] %v183
      %v186 = vld.sshfl [vmem:[#allocation1] sm:$0xff pattern:$0x75316420]
      %v187 = vld.sshfl [vmem:[#allocation1 + $0x8] sm:$0xff pattern:$0x75316420]
      %vm190 = vcmask 1043456
      %v191 = vsel %vm190, %v186, 0.0
      %v192 = vrot.slane %v191, 4
      %v193 = vadd.f32 %v191, %v192
      %v194 = vrot.slane %v193, 2
      %v195 = vadd.f32 %v193, %v194
      %v196 = vrot.slane %v195, 1
      %v197 = vadd.f32 %v195, %v196
      %v198 = vsel %vm190, %v187, 0.0
      %v199 = vrot.slane %v198, 4
      %v200 = vadd.f32 %v198, %v199
      %v201 = vrot.slane %v200, 2
      %v202 = vadd.f32 %v200, %v201
      %v203 = vrot.slane %v202, 1
      %v204 = vadd.f32 %v202, %v203
      %v205 = vmul.f32 %v197, 0.25
      %v206 = vmul.f32 %v204, 0.25
      %v209 = vrot.slane %v206, 4
      %v210 = vsel %vm190, %v205, %v209
      %v212 = vsub.f32 %v183, %v210
      %v213 = vmul.f32 %v212, %v212
      %215 = vst [vmem:[#allocation1] ss:$2 sm:$0xff] %v213
      %v216 = vld.sshfl [vmem:[#allocation1] sm:$0xff pattern:$0x75316420]
      %v217 = vld.sshfl [vmem:[#allocation1 + $0x8] sm:$0xff pattern:$0x75316420]
      %v220 = vsel %vm190, %v216, 0.0
      %v221 = vrot.slane %v220, 4
      %v222 = vadd.f32 %v220, %v221
      %v223 = vrot.slane %v222, 2
      %v224 = vadd.f32 %v222, %v223
      %v225 = vrot.slane %v224, 1
      %v226 = vadd.f32 %v224, %v225
      %v227 = vsel %vm190, %v217, 0.0
      %v228 = vrot.slane %v227, 4
      %v229 = vadd.f32 %v227, %v228
      %v230 = vrot.slane %v229, 2
      %v231 = vadd.f32 %v229, %v230
      %v232 = vrot.slane %v231, 1
      %v233 = vadd.f32 %v231, %v232
      %v234 = vmul.f32 %v226, 0.25
      %v235 = vmul.f32 %v233, 0.25
      %v236 = vadd.f32 %v234, 1e-05
      %v237 = vadd.f32 %v235, 1e-05
      %v238 = vrsqrt.pop %v236
      %v239 = vmul.f32 %v238, %v236
      %v240 = vmul.f32 %v239, %v238
      %v241 = vmul.f32 0.5, %v240
      %v242 = vsub.f32 1.5, %v241
      %v243 = vmul.f32 %v238, %v242
      %vm244 = vweird.f32 %v236
      %vm245 = vweird.f32 %v238
      %vm246 = vmor %vm244, %vm245
      %v247 = vsel %vm246, %v238, %v243
      %v248 = vrsqrt.pop %v237
      %v249 = vmul.f32 %v248, %v237
      %v250 = vmul.f32 %v249, %v248
      %v251 = vmul.f32 0.5, %v250
      %v252 = vsub.f32 1.5, %v251
      %v253 = vmul.f32 %v248, %v252
      %vm254 = vweird.f32 %v237
      %vm255 = vweird.f32 %v248
      %vm256 = vmor %vm254, %vm255
      %v257 = vsel %vm256, %v248, %v253
      %v260 = vrot.slane %v257, 4
      %v261 = vsel %vm190, %v247, %v260
      %v263 = vmul.f32 %v212, %v261
      %v264 = vld [vmem:[%s1] sm:$0xf]
      %266 = vset.pattern.permute.xlu0 0
      %267 = vperm.xlu0 %266, %v264
      %v268 = vpop.permute.xlu0 %267
      %v270 = vunpack.c.l.s4 839922192
      %v271 = vunpack.c.0.s8 %v270
      %v272 = vperm.slane %v268, %v271
      %v274 = vmul.f32 %v263, %v272
      %275 = vst [vmem:[%s181] sm:$0xff] %v274
      %s276 = smul.u32 2, %s18
      %p277 = scmp.lt.s32.totalorder %s17, 1
      %s278 = scalar_select %p277, %s17, 1
      %p279 = scmp.lt.s32.totalorder %s276, 1
      %s280 = scalar_select %p279, %s276, 1
      %s281 = smul.addr %s278, 2
      %s282 = sadd.s32 %s280, %s281
      %s283 = smul.addr %s282, 4
      %s284 = scalar_lea.vmem %s2, %s283
      // Predicated region
      $region29: #{layernorm_forward.1} parent=27 // pred_check
        %p285 = pneg %p94
      $region30: #{layernorm_forward.1} parent=27 // pred_check_branch
        %287 = sbr.rel (%p285) target = $region32
      $region31: #{layernorm_forward.1} parent=27 // pred_region
        %s288 = smul.u32 2, %s18
      $region32: #{layernorm_forward.1} parent=27 // pred_fallthru
        _
    $region28: #{layernorm_forward.1} parent=5 // pred_fallthru
      _
    %p289 = scmp.le.s32.totalorder 2, %s8
    // Predicated region
    $region33: #{layernorm_forward.1} parent=5 // pred_check
      %p290 = pneg %p289
    $region34: #{layernorm_forward.1} parent=5 // pred_check_branch
      %292 = sbr.rel (%p290) target = $region36
    $region35: #{layernorm_forward.1} parent=5 // pred_region
      %s293 = ssub.s32 %s8, 2
      // Predicated region
      $region37: #{layernorm_forward.1} parent=35 // pred_check
        %p294 = pneg %p100
      $region38: #{layernorm_forward.1} parent=35 // pred_check_branch
        %296 = sbr.rel (%p294) target = $region40
      $region39: #{layernorm_forward.1} parent=35 // pred_region
        %s297 = smul.u32 2, %s20
        %p298 = scmp.lt.s32.totalorder %s19, 1
        %s299 = scalar_select %p298, %s19, 1
        %p300 = scmp.lt.s32.totalorder %s297, 1
        %s301 = scalar_select %p300, %s297, 1
        %s302 = smul.addr %s299, 2
        %s303 = sadd.s32 %s301, %s302
        %s304 = smul.addr %s303, 4
        %s305 = scalar_lea.vmem %s2, %s304
      $region40: #{layernorm_forward.1} parent=35 // pred_fallthru
        _
    $region36: #{layernorm_forward.1} parent=5 // pred_fallthru
      _
  $region6: #{layernorm_forward.1} parent=0 // loop_footer
    %s12 = sadd.s32 1, %s8
  $region7: #{layernorm_forward.1} parent=0 // loop_footer_branch
    %7 = sbr.rel target = $region3
  $region8: #{layernorm_forward.1} parent=0 // loop_exit
    _

</llo_original>
